<compile_context>
chip_gen: v5e
topology: v5e:2x2
jax: 0.10.0
libtpu: 0.0.40
codegen_flags: <defaults>
</compile_context>

<pallas_src>
import math
import functools

import jax
import jax.numpy as jnp
from jax import lax
from jax.experimental import pallas as pl
from jax.experimental.pallas import tpu as pltpu


# -----------------------------------------------------------------------------
# Fused MHA kernel: single invocation, whole batch resident.
# Refs:
#   x_ref      : (B*S, D)          flattened activations
#   wfused_ref : (D, 2*Wq+2*Wk+Wv) [Wq*s | (Wq@P)*s | Wk | Wk@P | Wv]
#   wo_ref     : (H*Dh, D)         output-projection weight (pre-transposed)
#   bo_ref     : (1, D)            output-projection bias
#   cos_ref    : (B*S, D)          RoPE cos, duplicated onto (even, odd) lanes,
#                                  tiled over the batch
#   sin_ref    : (B*S, D)          RoPE sin, likewise
#   o_ref      : (B*S, D)          output
#   acc_ref    : (B*S, H*Dh) VMEM  per-head attention output slab (scratch)
# -----------------------------------------------------------------------------
def _mha_fused_kernel(x_ref, wfused_ref, wo_ref, bo_ref, cos_ref, sin_ref,
                      o_ref, acc_ref, *, batch, seq, n_heads, n_kv_heads,
                      head_dim):
    f32 = jnp.float32
    wq_w = n_heads * head_dim
    wk_w = n_kv_heads * head_dim

    x = x_ref[...].astype(f32)                                    # (B*S, D)

    # One MXU pass yields q, rot(q), k, rot(k), v for every row of the batch.
    # Pair-swap rotation and the 1/sqrt(Dh) scale are folded into the weights.
    qkv = jnp.dot(x, wfused_ref[...].astype(f32),
                  preferred_element_type=f32)                     # (B*S, 5D)

    off = 0
    q = qkv[:, off:off + wq_w];      off += wq_w
    q_rot = qkv[:, off:off + wq_w];  off += wq_w
    k = qkv[:, off:off + wk_w];      off += wk_w
    k_rot = qkv[:, off:off + wk_w];  off += wk_w
    v = qkv[:, off:off + wk_w]

    cos = cos_ref[...]
    sin = sin_ref[...]

    # Interleaved-pair RoPE over the full projection width: two VPU FMAs.
    xq = q * cos + q_rot * sin            # scale already folded into weights
    xk = k * cos + k_rot * sin

    # Per-(batch, head) attention, written straight into the VMEM slab at
    # static slices (no concatenate relayouts).  GQA via index mapping; the
    # zero KV cache at start_pos == 0 is the identity on keys/values.
    n_rep = n_heads // n_kv_heads
    for b in range(batch):
        r = b * seq
        for h in range(n_heads):
            kvh = h // n_rep
            qh = xq[r:r + seq, h * head_dim:(h + 1) * head_dim]   # (S, Dh)
            kh = xk[r:r + seq, kvh * head_dim:(kvh + 1) * head_dim]
            vh = v[r:r + seq, kvh * head_dim:(kvh + 1) * head_dim]

            s = lax.dot_general(qh, kh, (((1,), (1,)), ((), ())),
                                preferred_element_type=f32)       # (S, S)
            s = s - jnp.max(s, axis=-1, keepdims=True)
            p = jnp.exp(s)
            p = p * pl.reciprocal(jnp.sum(p, axis=-1, keepdims=True),
                                  approx=True)
            acc_ref[pl.ds(r, seq), pl.ds(h * head_dim, head_dim)] = (
                jnp.dot(p, vh, preferred_element_type=f32))       # (S, Dh)

    out = jnp.dot(acc_ref[...], wo_ref[...].astype(f32),
                  preferred_element_type=f32)                     # (B*S, D)
    out = out + bo_ref[...].astype(f32)
    o_ref[...] = out.astype(o_ref.dtype)


# -----------------------------------------------------------------------------
# Host-side prep helpers (run ONCE at parameter-prep time, not per forward)
# -----------------------------------------------------------------------------
def rope_tables_dup(width, seq_len, theta=10000.0):
    """cos/sin duplicated onto the interleaved (even, odd) lane positions."""
    j = jnp.arange(0, width, 2, dtype=jnp.float32)
    freqs = 1.0 / (theta ** (j / width))
    m = jnp.arange(seq_len, dtype=jnp.float32)
    ang = jnp.outer(m, freqs)                                     # (S, W//2)
    cos = jnp.repeat(jnp.cos(ang), 2, axis=-1)                    # (S, W)
    sin = jnp.repeat(jnp.sin(ang), 2, axis=-1)                    # (S, W)
    return cos, sin


def signed_pair_swap(width):
    """P with P[2j+1, 2j] = -1 and P[2j, 2j+1] = +1: x @ P = [-x_odd, x_even]."""
    p = jnp.zeros((width, width), jnp.float32)
    ev = jnp.arange(0, width, 2)
    p = p.at[ev + 1, ev].set(-1.0)
    p = p.at[ev, ev + 1].set(1.0)
    return p


class SmallArgs:
    dim = 32
    n_heads = 4
    n_kv_heads = 4
    max_batch_size = 4
    max_seq_len = 16
    theta = 10000.0


def prepare_mha_params(params, cfg, batch_size, seq_len):
    """One-time weight folding + RoPE table construction."""
    D = cfg.dim
    H = cfg.n_heads
    Hkv = cfg.n_kv_heads
    Dh = D // H
    assert H * Dh == D
    # RoPE-over-full-width (head_dim=args.dim in the reference) requires the
    # K/V projection width to equal dim for the broadcast to be valid.
    assert Hkv * Dh == D, "requires n_kv_heads*head_dim == dim"
    scale = 1.0 / math.sqrt(Dh)

    wq_t, wk_t, wv_t = params["wq_t"], params["wk_t"], params["wv_t"]
    p_q = signed_pair_swap(wq_t.shape[1])
    p_k = signed_pair_swap(wk_t.shape[1])

    # [Wq*scale | (Wq@P)*scale | Wk | Wk@P | Wv] — one matmul gives every
    # projection plus its pair-swapped rotation; q-scale is pre-folded.
    w_fused = jnp.concatenate(
        [wq_t * scale, (wq_t @ p_q) * scale, wk_t, wk_t @ p_k, wv_t], axis=1)

    cos, sin = rope_tables_dup(D, seq_len, cfg.theta)             # (S, D)
    cos = jnp.tile(cos, (batch_size, 1))                          # (B*S, D)
    sin = jnp.tile(sin, (batch_size, 1))

    return {
        "w_fused": w_fused,
        "wo_t": params["wo_t"],
        "bo": params["bo"].reshape(1, D),
        "cos": cos,
        "sin": sin,
    }


# -----------------------------------------------------------------------------
# MHA forward (single fused pallas_call, no grid — whole batch per step)
# -----------------------------------------------------------------------------
def mha_forward(x, prepped, cfg=SmallArgs, start_pos=0):
    # TODO(synk): start_pos > 0 would attend to the zero-initialised cache in
    # the reference module; only the meaningful start_pos == 0 path is fused.
    assert start_pos == 0
    B, S, D = x.shape
    H, Hkv = cfg.n_heads, cfg.n_kv_heads
    Dh = cfg.dim // cfg.n_heads

    x2 = x.reshape(B * S, D)  # free (contiguous) — taller matmuls on the MXU

    kern = functools.partial(
        _mha_fused_kernel,
        batch=B, seq=S, n_heads=H, n_kv_heads=Hkv, head_dim=Dh,
    )

    out2 = pl.pallas_call(
        kern,
        out_shape=jax.ShapeDtypeStruct((B * S, D), x.dtype),
        scratch_shapes=[pltpu.VMEM((B * S, H * Dh), jnp.float32)],
    )(x2, prepped["w_fused"], prepped["wo_t"], prepped["bo"],
      prepped["cos"], prepped["sin"])

    return out2.reshape(B, S, D)


# -----------------------------------------------------------------------------
# Pure-JAX reference (independent of the kernel's pair-swap/weight-fold form)
# -----------------------------------------------------------------------------
def _ref_rope_tables(width, seq_len, theta=10000.0):
    j = jnp.arange(0, width, 2, dtype=jnp.float32)
    freqs = 1.0 / (theta ** (j / width))
    m = jnp.arange(seq_len, dtype=jnp.float32)
    ang = jnp.outer(m, freqs)
    return jnp.cos(ang), jnp.sin(ang)


def _ref_apply_rope(x, cos, sin):
    B, S, W = x.shape
    xr = x.astype(jnp.float32).reshape(B, S, W // 2, 2)
    xe, xo = xr[..., 0], xr[..., 1]
    re = xe * cos - xo * sin
    im = xe * sin + xo * cos
    return jnp.stack([re, im], axis=-1).reshape(B, S, W).astype(x.dtype)


def mha_reference(x, params, cfg=SmallArgs, start_pos=0):
    B, S, D = x.shape
    H, Hkv = cfg.n_heads, cfg.n_kv_heads
    Dh = cfg.dim // cfg.n_heads
    n_rep = H // Hkv

    xq = x @ params["wq_t"]
    xk = x @ params["wk_t"]
    xv = x @ params["wv_t"]
    cos, sin = _ref_rope_tables(cfg.dim, S, cfg.theta)
    xq = _ref_apply_rope(xq, cos, sin)
    xk = _ref_apply_rope(xk, cos, sin)
    xq = xq.reshape(B, S, H, Dh)
    xk = xk.reshape(B, S, Hkv, Dh)
    xv = xv.reshape(B, S, Hkv, Dh)
    keys = jnp.repeat(xk, n_rep, axis=2) if n_rep > 1 else xk
    values = jnp.repeat(xv, n_rep, axis=2) if n_rep > 1 else xv
    q = xq.transpose(0, 2, 1, 3)
    k = keys.transpose(0, 2, 1, 3)
    v = values.transpose(0, 2, 1, 3)
    scores = jnp.einsum("bhqd,bhkd->bhqk", q, k) / math.sqrt(Dh)
    probs = jax.nn.softmax(scores.astype(jnp.float32), axis=-1).astype(q.dtype)
    o = jnp.einsum("bhqk,bhkd->bhqd", probs, v)
    o = o.transpose(0, 2, 1, 3).reshape(B, S, H * Dh)
    return o @ params["wo_t"] + params["bo"]


# -----------------------------------------------------------------------------
# Main
# -----------------------------------------------------------------------------
if __name__ == "__main__":
    cfg = SmallArgs
    B, S = 2, 8
    dim = cfg.dim
    head_dim = dim // cfg.n_heads

    key = jax.random.PRNGKey(0)
    k1, k2, k3, k4, k5, kx = jax.random.split(key, 6)

    # nn.Linear-style uniform(-1/sqrt(fan_in), 1/sqrt(fan_in)) init,
    # weights stored transposed as (in, out).
    s_in = 1.0 / math.sqrt(dim)
    s_out = 1.0 / math.sqrt(cfg.n_heads * head_dim)
    params = {
        "wq_t": jax.random.uniform(
            k1, (dim, cfg.n_heads * head_dim), jnp.float32, -s_in, s_in),
        "wk_t": jax.random.uniform(
            k2, (dim, cfg.n_kv_heads * head_dim), jnp.float32, -s_in, s_in),
        "wv_t": jax.random.uniform(
            k3, (dim, cfg.n_kv_heads * head_dim), jnp.float32, -s_in, s_in),
        "wo_t": jax.random.uniform(
            k4, (cfg.n_heads * head_dim, dim), jnp.float32, -s_out, s_out),
        "bo": jax.random.uniform(k5, (dim,), jnp.float32, -s_out, s_out),
    }

    x = jax.random.normal(kx, (B, S, dim), jnp.float32)

    # One-time prep (weight folding, RoPE tables) — hoisted out of the forward.
    prepped = prepare_mha_params(params, cfg, batch_size=B, seq_len=S)

    out = jax.block_until_ready(mha_forward(x, prepped, cfg, start_pos=0))
    ref = mha_reference(x, params, cfg, start_pos=0)

    assert out.shape == (B, S, dim)
    # Tolerance loosened slightly vs. the exact-division reference because the
    # kernel uses the EUP approximate reciprocal for the softmax denominator.
    assert jnp.allclose(out, ref, rtol=2e-3, atol=2e-3), "mismatch vs reference"

    print("KERNEL_OK")
</pallas_src>

<mosaic_0001>
module attributes {stable_mosaic.version = 11 : i64} {
  func.func @_mha_fused_kernel(%arg0: memref<16x32xf32, #tpu.memory_space<vmem>>, %arg1: memref<32x160xf32, #tpu.memory_space<vmem>>, %arg2: memref<32x32xf32, #tpu.memory_space<vmem>>, %arg3: memref<1x32xf32, #tpu.memory_space<vmem>>, %arg4: memref<16x32xf32, #tpu.memory_space<vmem>>, %arg5: memref<16x32xf32, #tpu.memory_space<vmem>>, %arg6: memref<16x32xf32, #tpu.memory_space<vmem>>, %arg7: memref<16x32xf32, #tpu.memory_space<vmem>>) attributes {dimension_semantics = [], scalar_prefetch = 0 : i64, scratch_operands = 1 : i64, tpu.core_type = #tpu.core_type<tc>} {
    %c0 = arith.constant 0 : index
    %c0_0 = arith.constant 0 : index
    %0 = vector.load %arg0[%c0, %c0_0] : memref<16x32xf32, #tpu.memory_space<vmem>>, vector<16x32xf32>
    %c0_1 = arith.constant 0 : index
    %c0_2 = arith.constant 0 : index
    %1 = vector.load %arg1[%c0_1, %c0_2] : memref<32x160xf32, #tpu.memory_space<vmem>>, vector<32x160xf32>
    %cst = arith.constant dense<0.000000e+00> : vector<16x160xf32>
    %2 = tpu.matmul %0, %1, %cst {dimension_numbers = #tpu.dot_dimension_numbers<[1], [0], [0], [1], [0, 0, 1, 1], [], []>} : vector<16x32xf32>, vector<32x160xf32>, vector<16x160xf32> -> vector<16x160xf32>
    %3 = vector.extract_strided_slice %2 {offsets = [0, 0], sizes = [16, 32], strides = [1, 1]} : vector<16x160xf32> to vector<16x32xf32>
    %4 = vector.extract_strided_slice %2 {offsets = [0, 32], sizes = [16, 32], strides = [1, 1]} : vector<16x160xf32> to vector<16x32xf32>
    %5 = vector.extract_strided_slice %2 {offsets = [0, 64], sizes = [16, 32], strides = [1, 1]} : vector<16x160xf32> to vector<16x32xf32>
    %6 = vector.extract_strided_slice %2 {offsets = [0, 96], sizes = [16, 32], strides = [1, 1]} : vector<16x160xf32> to vector<16x32xf32>
    %7 = vector.extract_strided_slice %2 {offsets = [0, 128], sizes = [16, 32], strides = [1, 1]} : vector<16x160xf32> to vector<16x32xf32>
    %c0_3 = arith.constant 0 : index
    %c0_4 = arith.constant 0 : index
    %8 = vector.load %arg4[%c0_3, %c0_4] : memref<16x32xf32, #tpu.memory_space<vmem>>, vector<16x32xf32>
    %c0_5 = arith.constant 0 : index
    %c0_6 = arith.constant 0 : index
    %9 = vector.load %arg5[%c0_5, %c0_6] : memref<16x32xf32, #tpu.memory_space<vmem>>, vector<16x32xf32>
    %10 = arith.mulf %3, %8 : vector<16x32xf32>
    %11 = arith.mulf %4, %9 : vector<16x32xf32>
    %12 = arith.addf %10, %11 : vector<16x32xf32>
    %13 = arith.mulf %5, %8 : vector<16x32xf32>
    %14 = arith.mulf %6, %9 : vector<16x32xf32>
    %15 = arith.addf %13, %14 : vector<16x32xf32>
    %16 = vector.extract_strided_slice %12 {offsets = [0, 0], sizes = [8, 8], strides = [1, 1]} : vector<16x32xf32> to vector<8x8xf32>
    %17 = vector.extract_strided_slice %15 {offsets = [0, 0], sizes = [8, 8], strides = [1, 1]} : vector<16x32xf32> to vector<8x8xf32>
    %18 = vector.extract_strided_slice %7 {offsets = [0, 0], sizes = [8, 8], strides = [1, 1]} : vector<16x32xf32> to vector<8x8xf32>
    %cst_7 = arith.constant dense<0.000000e+00> : vector<8x8xf32>
    %19 = tpu.matmul %16, %17, %cst_7 {dimension_numbers = #tpu.dot_dimension_numbers<[1], [1], [0], [0], [0, 0, 1, 0], [], []>} : vector<8x8xf32>, vector<8x8xf32>, vector<8x8xf32> -> vector<8x8xf32>
    %cst_8 = arith.constant dense<0xFF800000> : vector<8xf32>
    %20 = vector.multi_reduction <maximumf>, %19, %cst_8 [1] : vector<8x8xf32> to vector<8xf32>
    %21 = vector.shape_cast %20 : vector<8xf32> to vector<8x1xf32>
    %22 = vector.broadcast %21 : vector<8x1xf32> to vector<8x8xf32>
    %23 = arith.subf %19, %22 : vector<8x8xf32>
    %24 = math.exp %23 : vector<8x8xf32>
    %cst_9 = arith.constant dense<0.000000e+00> : vector<8xf32>
    %25 = vector.multi_reduction <add>, %24, %cst_9 [1] : vector<8x8xf32> to vector<8xf32>
    %26 = vector.shape_cast %25 : vector<8xf32> to vector<8x1xf32>
    %27 = tpu.reciprocal %26 {approx = true} : vector<8x1xf32> -> vector<8x1xf32>
    %28 = vector.broadcast %27 : vector<8x1xf32> to vector<8x8xf32>
    %29 = arith.mulf %24, %28 : vector<8x8xf32>
    %cst_10 = arith.constant dense<0.000000e+00> : vector<8x8xf32>
    %30 = tpu.matmul %29, %18, %cst_10 {dimension_numbers = #tpu.dot_dimension_numbers<[1], [0], [0], [1], [0, 0, 1, 1], [], []>} : vector<8x8xf32>, vector<8x8xf32>, vector<8x8xf32> -> vector<8x8xf32>
    %c0_11 = arith.constant 0 : index
    %c0_12 = arith.constant 0 : index
    %31 = vector.load %arg7[%c0_11, %c0_12] : memref<16x32xf32, #tpu.memory_space<vmem>>, vector<8x8xf32>
    tpu.vector_store %arg7[%c0_11, %c0_12], %30 {strides = array<i32>} : memref<16x32xf32, #tpu.memory_space<vmem>>, vector<8x8xf32>,
    %32 = vector.extract_strided_slice %12 {offsets = [0, 8], sizes = [8, 8], strides = [1, 1]} : vector<16x32xf32> to vector<8x8xf32>
    %33 = vector.extract_strided_slice %15 {offsets = [0, 8], sizes = [8, 8], strides = [1, 1]} : vector<16x32xf32> to vector<8x8xf32>
    %34 = vector.extract_strided_slice %7 {offsets = [0, 8], sizes = [8, 8], strides = [1, 1]} : vector<16x32xf32> to vector<8x8xf32>
    %cst_13 = arith.constant dense<0.000000e+00> : vector<8x8xf32>
    %35 = tpu.matmul %32, %33, %cst_13 {dimension_numbers = #tpu.dot_dimension_numbers<[1], [1], [0], [0], [0, 0, 1, 0], [], []>} : vector<8x8xf32>, vector<8x8xf32>, vector<8x8xf32> -> vector<8x8xf32>
    %cst_14 = arith.constant dense<0xFF800000> : vector<8xf32>
    %36 = vector.multi_reduction <maximumf>, %35, %cst_14 [1] : vector<8x8xf32> to vector<8xf32>
    %37 = vector.shape_cast %36 : vector<8xf32> to vector<8x1xf32>
    %38 = vector.broadcast %37 : vector<8x1xf32> to vector<8x8xf32>
    %39 = arith.subf %35, %38 : vector<8x8xf32>
    %40 = math.exp %39 : vector<8x8xf32>
    %cst_15 = arith.constant dense<0.000000e+00> : vector<8xf32>
    %41 = vector.multi_reduction <add>, %40, %cst_15 [1] : vector<8x8xf32> to vector<8xf32>
    %42 = vector.shape_cast %41 : vector<8xf32> to vector<8x1xf32>
    %43 = tpu.reciprocal %42 {approx = true} : vector<8x1xf32> -> vector<8x1xf32>
    %44 = vector.broadcast %43 : vector<8x1xf32> to vector<8x8xf32>
    %45 = arith.mulf %40, %44 : vector<8x8xf32>
    %cst_16 = arith.constant dense<0.000000e+00> : vector<8x8xf32>
    %46 = tpu.matmul %45, %34, %cst_16 {dimension_numbers = #tpu.dot_dimension_numbers<[1], [0], [0], [1], [0, 0, 1, 1], [], []>} : vector<8x8xf32>, vector<8x8xf32>, vector<8x8xf32> -> vector<8x8xf32>
    %c0_17 = arith.constant 0 : index
    %c8 = arith.constant 8 : index
    %47 = vector.load %arg7[%c0_17, %c8] : memref<16x32xf32, #tpu.memory_space<vmem>>, vector<8x8xf32>
    tpu.vector_store %arg7[%c0_17, %c8], %46 {strides = array<i32>} : memref<16x32xf32, #tpu.memory_space<vmem>>, vector<8x8xf32>,
    %48 = vector.extract_strided_slice %12 {offsets = [0, 16], sizes = [8, 8], strides = [1, 1]} : vector<16x32xf32> to vector<8x8xf32>
    %49 = vector.extract_strided_slice %15 {offsets = [0, 16], sizes = [8, 8], strides = [1, 1]} : vector<16x32xf32> to vector<8x8xf32>
    %50 = vector.extract_strided_slice %7 {offsets = [0, 16], sizes = [8, 8], strides = [1, 1]} : vector<16x32xf32> to vector<8x8xf32>
    %cst_18 = arith.constant dense<0.000000e+00> : vector<8x8xf32>
    %51 = tpu.matmul %48, %49, %cst_18 {dimension_numbers = #tpu.dot_dimension_numbers<[1], [1], [0], [0], [0, 0, 1, 0], [], []>} : vector<8x8xf32>, vector<8x8xf32>, vector<8x8xf32> -> vector<8x8xf32>
    %cst_19 = arith.constant dense<0xFF800000> : vector<8xf32>
    %52 = vector.multi_reduction <maximumf>, %51, %cst_19 [1] : vector<8x8xf32> to vector<8xf32>
    %53 = vector.shape_cast %52 : vector<8xf32> to vector<8x1xf32>
    %54 = vector.broadcast %53 : vector<8x1xf32> to vector<8x8xf32>
    %55 = arith.subf %51, %54 : vector<8x8xf32>
    %56 = math.exp %55 : vector<8x8xf32>
    %cst_20 = arith.constant dense<0.000000e+00> : vector<8xf32>
    %57 = vector.multi_reduction <add>, %56, %cst_20 [1] : vector<8x8xf32> to vector<8xf32>
    %58 = vector.shape_cast %57 : vector<8xf32> to vector<8x1xf32>
    %59 = tpu.reciprocal %58 {approx = true} : vector<8x1xf32> -> vector<8x1xf32>
    %60 = vector.broadcast %59 : vector<8x1xf32> to vector<8x8xf32>
    %61 = arith.mulf %56, %60 : vector<8x8xf32>
    %cst_21 = arith.constant dense<0.000000e+00> : vector<8x8xf32>
    %62 = tpu.matmul %61, %50, %cst_21 {dimension_numbers = #tpu.dot_dimension_numbers<[1], [0], [0], [1], [0, 0, 1, 1], [], []>} : vector<8x8xf32>, vector<8x8xf32>, vector<8x8xf32> -> vector<8x8xf32>
    %c0_22 = arith.constant 0 : index
    %c16 = arith.constant 16 : index
    %63 = vector.load %arg7[%c0_22, %c16] : memref<16x32xf32, #tpu.memory_space<vmem>>, vector<8x8xf32>
    tpu.vector_store %arg7[%c0_22, %c16], %62 {strides = array<i32>} : memref<16x32xf32, #tpu.memory_space<vmem>>, vector<8x8xf32>,
    %64 = vector.extract_strided_slice %12 {offsets = [0, 24], sizes = [8, 8], strides = [1, 1]} : vector<16x32xf32> to vector<8x8xf32>
    %65 = vector.extract_strided_slice %15 {offsets = [0, 24], sizes = [8, 8], strides = [1, 1]} : vector<16x32xf32> to vector<8x8xf32>
    %66 = vector.extract_strided_slice %7 {offsets = [0, 24], sizes = [8, 8], strides = [1, 1]} : vector<16x32xf32> to vector<8x8xf32>
    %cst_23 = arith.constant dense<0.000000e+00> : vector<8x8xf32>
    %67 = tpu.matmul %64, %65, %cst_23 {dimension_numbers = #tpu.dot_dimension_numbers<[1], [1], [0], [0], [0, 0, 1, 0], [], []>} : vector<8x8xf32>, vector<8x8xf32>, vector<8x8xf32> -> vector<8x8xf32>
    %cst_24 = arith.constant dense<0xFF800000> : vector<8xf32>
    %68 = vector.multi_reduction <maximumf>, %67, %cst_24 [1] : vector<8x8xf32> to vector<8xf32>
    %69 = vector.shape_cast %68 : vector<8xf32> to vector<8x1xf32>
    %70 = vector.broadcast %69 : vector<8x1xf32> to vector<8x8xf32>
    %71 = arith.subf %67, %70 : vector<8x8xf32>
    %72 = math.exp %71 : vector<8x8xf32>
    %cst_25 = arith.constant dense<0.000000e+00> : vector<8xf32>
    %73 = vector.multi_reduction <add>, %72, %cst_25 [1] : vector<8x8xf32> to vector<8xf32>
    %74 = vector.shape_cast %73 : vector<8xf32> to vector<8x1xf32>
    %75 = tpu.reciprocal %74 {approx = true} : vector<8x1xf32> -> vector<8x1xf32>
    %76 = vector.broadcast %75 : vector<8x1xf32> to vector<8x8xf32>
    %77 = arith.mulf %72, %76 : vector<8x8xf32>
    %cst_26 = arith.constant dense<0.000000e+00> : vector<8x8xf32>
    %78 = tpu.matmul %77, %66, %cst_26 {dimension_numbers = #tpu.dot_dimension_numbers<[1], [0], [0], [1], [0, 0, 1, 1], [], []>} : vector<8x8xf32>, vector<8x8xf32>, vector<8x8xf32> -> vector<8x8xf32>
    %c0_27 = arith.constant 0 : index
    %c24 = arith.constant 24 : index
    %79 = vector.load %arg7[%c0_27, %c24] : memref<16x32xf32, #tpu.memory_space<vmem>>, vector<8x8xf32>
    tpu.vector_store %arg7[%c0_27, %c24], %78 {strides = array<i32>} : memref<16x32xf32, #tpu.memory_space<vmem>>, vector<8x8xf32>,
    %80 = vector.extract_strided_slice %12 {offsets = [8, 0], sizes = [8, 8], strides = [1, 1]} : vector<16x32xf32> to vector<8x8xf32>
    %81 = vector.extract_strided_slice %15 {offsets = [8, 0], sizes = [8, 8], strides = [1, 1]} : vector<16x32xf32> to vector<8x8xf32>
    %82 = vector.extract_strided_slice %7 {offsets = [8, 0], sizes = [8, 8], strides = [1, 1]} : vector<16x32xf32> to vector<8x8xf32>
    %cst_28 = arith.constant dense<0.000000e+00> : vector<8x8xf32>
    %83 = tpu.matmul %80, %81, %cst_28 {dimension_numbers = #tpu.dot_dimension_numbers<[1], [1], [0], [0], [0, 0, 1, 0], [], []>} : vector<8x8xf32>, vector<8x8xf32>, vector<8x8xf32> -> vector<8x8xf32>
    %cst_29 = arith.constant dense<0xFF800000> : vector<8xf32>
    %84 = vector.multi_reduction <maximumf>, %83, %cst_29 [1] : vector<8x8xf32> to vector<8xf32>
    %85 = vector.shape_cast %84 : vector<8xf32> to vector<8x1xf32>
    %86 = vector.broadcast %85 : vector<8x1xf32> to vector<8x8xf32>
    %87 = arith.subf %83, %86 : vector<8x8xf32>
    %88 = math.exp %87 : vector<8x8xf32>
    %cst_30 = arith.constant dense<0.000000e+00> : vector<8xf32>
    %89 = vector.multi_reduction <add>, %88, %cst_30 [1] : vector<8x8xf32> to vector<8xf32>
    %90 = vector.shape_cast %89 : vector<8xf32> to vector<8x1xf32>
    %91 = tpu.reciprocal %90 {approx = true} : vector<8x1xf32> -> vector<8x1xf32>
    %92 = vector.broadcast %91 : vector<8x1xf32> to vector<8x8xf32>
    %93 = arith.mulf %88, %92 : vector<8x8xf32>
    %cst_31 = arith.constant dense<0.000000e+00> : vector<8x8xf32>
    %94 = tpu.matmul %93, %82, %cst_31 {dimension_numbers = #tpu.dot_dimension_numbers<[1], [0], [0], [1], [0, 0, 1, 1], [], []>} : vector<8x8xf32>, vector<8x8xf32>, vector<8x8xf32> -> vector<8x8xf32>
    %c8_32 = arith.constant 8 : index
    %c0_33 = arith.constant 0 : index
    %95 = vector.load %arg7[%c8_32, %c0_33] : memref<16x32xf32, #tpu.memory_space<vmem>>, vector<8x8xf32>
    tpu.vector_store %arg7[%c8_32, %c0_33], %94 {strides = array<i32>} : memref<16x32xf32, #tpu.memory_space<vmem>>, vector<8x8xf32>,
    %96 = vector.extract_strided_slice %12 {offsets = [8, 8], sizes = [8, 8], strides = [1, 1]} : vector<16x32xf32> to vector<8x8xf32>
    %97 = vector.extract_strided_slice %15 {offsets = [8, 8], sizes = [8, 8], strides = [1, 1]} : vector<16x32xf32> to vector<8x8xf32>
    %98 = vector.extract_strided_slice %7 {offsets = [8, 8], sizes = [8, 8], strides = [1, 1]} : vector<16x32xf32> to vector<8x8xf32>
    %cst_34 = arith.constant dense<0.000000e+00> : vector<8x8xf32>
    %99 = tpu.matmul %96, %97, %cst_34 {dimension_numbers = #tpu.dot_dimension_numbers<[1], [1], [0], [0], [0, 0, 1, 0], [], []>} : vector<8x8xf32>, vector<8x8xf32>, vector<8x8xf32> -> vector<8x8xf32>
    %cst_35 = arith.constant dense<0xFF800000> : vector<8xf32>
    %100 = vector.multi_reduction <maximumf>, %99, %cst_35 [1] : vector<8x8xf32> to vector<8xf32>
    %101 = vector.shape_cast %100 : vector<8xf32> to vector<8x1xf32>
    %102 = vector.broadcast %101 : vector<8x1xf32> to vector<8x8xf32>
    %103 = arith.subf %99, %102 : vector<8x8xf32>
    %104 = math.exp %103 : vector<8x8xf32>
    %cst_36 = arith.constant dense<0.000000e+00> : vector<8xf32>
    %105 = vector.multi_reduction <add>, %104, %cst_36 [1] : vector<8x8xf32> to vector<8xf32>
    %106 = vector.shape_cast %105 : vector<8xf32> to vector<8x1xf32>
    %107 = tpu.reciprocal %106 {approx = true} : vector<8x1xf32> -> vector<8x1xf32>
    %108 = vector.broadcast %107 : vector<8x1xf32> to vector<8x8xf32>
    %109 = arith.mulf %104, %108 : vector<8x8xf32>
    %cst_37 = arith.constant dense<0.000000e+00> : vector<8x8xf32>
    %110 = tpu.matmul %109, %98, %cst_37 {dimension_numbers = #tpu.dot_dimension_numbers<[1], [0], [0], [1], [0, 0, 1, 1], [], []>} : vector<8x8xf32>, vector<8x8xf32>, vector<8x8xf32> -> vector<8x8xf32>
    %c8_38 = arith.constant 8 : index
    %c8_39 = arith.constant 8 : index
    %111 = vector.load %arg7[%c8_38, %c8_39] : memref<16x32xf32, #tpu.memory_space<vmem>>, vector<8x8xf32>
    tpu.vector_store %arg7[%c8_38, %c8_39], %110 {strides = array<i32>} : memref<16x32xf32, #tpu.memory_space<vmem>>, vector<8x8xf32>,
    %112 = vector.extract_strided_slice %12 {offsets = [8, 16], sizes = [8, 8], strides = [1, 1]} : vector<16x32xf32> to vector<8x8xf32>
    %113 = vector.extract_strided_slice %15 {offsets = [8, 16], sizes = [8, 8], strides = [1, 1]} : vector<16x32xf32> to vector<8x8xf32>
    %114 = vector.extract_strided_slice %7 {offsets = [8, 16], sizes = [8, 8], strides = [1, 1]} : vector<16x32xf32> to vector<8x8xf32>
    %cst_40 = arith.constant dense<0.000000e+00> : vector<8x8xf32>
    %115 = tpu.matmul %112, %113, %cst_40 {dimension_numbers = #tpu.dot_dimension_numbers<[1], [1], [0], [0], [0, 0, 1, 0], [], []>} : vector<8x8xf32>, vector<8x8xf32>, vector<8x8xf32> -> vector<8x8xf32>
    %cst_41 = arith.constant dense<0xFF800000> : vector<8xf32>
    %116 = vector.multi_reduction <maximumf>, %115, %cst_41 [1] : vector<8x8xf32> to vector<8xf32>
    %117 = vector.shape_cast %116 : vector<8xf32> to vector<8x1xf32>
    %118 = vector.broadcast %117 : vector<8x1xf32> to vector<8x8xf32>
    %119 = arith.subf %115, %118 : vector<8x8xf32>
    %120 = math.exp %119 : vector<8x8xf32>
    %cst_42 = arith.constant dense<0.000000e+00> : vector<8xf32>
    %121 = vector.multi_reduction <add>, %120, %cst_42 [1] : vector<8x8xf32> to vector<8xf32>
    %122 = vector.shape_cast %121 : vector<8xf32> to vector<8x1xf32>
    %123 = tpu.reciprocal %122 {approx = true} : vector<8x1xf32> -> vector<8x1xf32>
    %124 = vector.broadcast %123 : vector<8x1xf32> to vector<8x8xf32>
    %125 = arith.mulf %120, %124 : vector<8x8xf32>
    %cst_43 = arith.constant dense<0.000000e+00> : vector<8x8xf32>
    %126 = tpu.matmul %125, %114, %cst_43 {dimension_numbers = #tpu.dot_dimension_numbers<[1], [0], [0], [1], [0, 0, 1, 1], [], []>} : vector<8x8xf32>, vector<8x8xf32>, vector<8x8xf32> -> vector<8x8xf32>
    %c8_44 = arith.constant 8 : index
    %c16_45 = arith.constant 16 : index
    %127 = vector.load %arg7[%c8_44, %c16_45] : memref<16x32xf32, #tpu.memory_space<vmem>>, vector<8x8xf32>
    tpu.vector_store %arg7[%c8_44, %c16_45], %126 {strides = array<i32>} : memref<16x32xf32, #tpu.memory_space<vmem>>, vector<8x8xf32>,
    %128 = vector.extract_strided_slice %12 {offsets = [8, 24], sizes = [8, 8], strides = [1, 1]} : vector<16x32xf32> to vector<8x8xf32>
    %129 = vector.extract_strided_slice %15 {offsets = [8, 24], sizes = [8, 8], strides = [1, 1]} : vector<16x32xf32> to vector<8x8xf32>
    %130 = vector.extract_strided_slice %7 {offsets = [8, 24], sizes = [8, 8], strides = [1, 1]} : vector<16x32xf32> to vector<8x8xf32>
    %cst_46 = arith.constant dense<0.000000e+00> : vector<8x8xf32>
    %131 = tpu.matmul %128, %129, %cst_46 {dimension_numbers = #tpu.dot_dimension_numbers<[1], [1], [0], [0], [0, 0, 1, 0], [], []>} : vector<8x8xf32>, vector<8x8xf32>, vector<8x8xf32> -> vector<8x8xf32>
    %cst_47 = arith.constant dense<0xFF800000> : vector<8xf32>
    %132 = vector.multi_reduction <maximumf>, %131, %cst_47 [1] : vector<8x8xf32> to vector<8xf32>
    %133 = vector.shape_cast %132 : vector<8xf32> to vector<8x1xf32>
    %134 = vector.broadcast %133 : vector<8x1xf32> to vector<8x8xf32>
    %135 = arith.subf %131, %134 : vector<8x8xf32>
    %136 = math.exp %135 : vector<8x8xf32>
    %cst_48 = arith.constant dense<0.000000e+00> : vector<8xf32>
    %137 = vector.multi_reduction <add>, %136, %cst_48 [1] : vector<8x8xf32> to vector<8xf32>
    %138 = vector.shape_cast %137 : vector<8xf32> to vector<8x1xf32>
    %139 = tpu.reciprocal %138 {approx = true} : vector<8x1xf32> -> vector<8x1xf32>
    %140 = vector.broadcast %139 : vector<8x1xf32> to vector<8x8xf32>
    %141 = arith.mulf %136, %140 : vector<8x8xf32>
    %cst_49 = arith.constant dense<0.000000e+00> : vector<8x8xf32>
    %142 = tpu.matmul %141, %130, %cst_49 {dimension_numbers = #tpu.dot_dimension_numbers<[1], [0], [0], [1], [0, 0, 1, 1], [], []>} : vector<8x8xf32>, vector<8x8xf32>, vector<8x8xf32> -> vector<8x8xf32>
    %c8_50 = arith.constant 8 : index
    %c24_51 = arith.constant 24 : index
    %143 = vector.load %arg7[%c8_50, %c24_51] : memref<16x32xf32, #tpu.memory_space<vmem>>, vector<8x8xf32>
    tpu.vector_store %arg7[%c8_50, %c24_51], %142 {strides = array<i32>} : memref<16x32xf32, #tpu.memory_space<vmem>>, vector<8x8xf32>,
    %c0_52 = arith.constant 0 : index
    %c0_53 = arith.constant 0 : index
    %144 = vector.load %arg7[%c0_52, %c0_53] : memref<16x32xf32, #tpu.memory_space<vmem>>, vector<16x32xf32>
    %c0_54 = arith.constant 0 : index
    %c0_55 = arith.constant 0 : index
    %145 = vector.load %arg2[%c0_54, %c0_55] : memref<32x32xf32, #tpu.memory_space<vmem>>, vector<32x32xf32>
    %cst_56 = arith.constant dense<0.000000e+00> : vector<16x32xf32>
    %146 = tpu.matmul %144, %145, %cst_56 {dimension_numbers = #tpu.dot_dimension_numbers<[1], [0], [0], [1], [0, 0, 1, 1], [], []>} : vector<16x32xf32>, vector<32x32xf32>, vector<16x32xf32> -> vector<16x32xf32>
    %c0_57 = arith.constant 0 : index
    %c0_58 = arith.constant 0 : index
    %147 = vector.load %arg3[%c0_57, %c0_58] : memref<1x32xf32, #tpu.memory_space<vmem>>, vector<1x32xf32>
    %148 = vector.broadcast %147 : vector<1x32xf32> to vector<16x32xf32>
    %149 = arith.addf %146, %148 : vector<16x32xf32>
    %c0_59 = arith.constant 0 : index
    %c0_60 = arith.constant 0 : index
    %150 = vector.load %arg6[%c0_59, %c0_60] : memref<16x32xf32, #tpu.memory_space<vmem>>, vector<16x32xf32>
    tpu.vector_store %arg6[%c0_59, %c0_60], %149 {strides = array<i32>} : memref<16x32xf32, #tpu.memory_space<vmem>>, vector<16x32xf32>,
    return
  }
}

</mosaic_0001>

<llo_original>
// kernel: tpu_custom_call.1
$region0: #{tpu_custom_call.1}
  #allocation0 [shape = 'u32[]', space=smem, size = 0x4, offset = 0x4, fixed_abs, tag = 'smem constant byte address 0x4 - core index']
  #allocation1 [shape = 'u32[72,128]{1,0:T(1,128)}', space=vmem, size = 0x9000, scoped, tag = 'internal scratch']
  #allocation2 [shape = 'f32[16,32]{1,0:T(8,128)}', space=vmem, size = 0x2000, scoped, tag = 'scratch operand']
  %s0 = inlined_call_operand.hbm [shape: f32[16,32], index: 0, kind: input, shape index: {}]
  %s1 = inlined_call_operand.hbm [shape: f32[32,160], index: 1, kind: input, shape index: {}]
  %s2 = inlined_call_operand.hbm [shape: f32[32,32], index: 2, kind: input, shape index: {}]
  %s3 = inlined_call_operand.vmem [shape: f32[1,32], index: 3, kind: input, shape index: {}]
  %s4 = inlined_call_operand.hbm [shape: f32[16,32], index: 4, kind: input, shape index: {}]
  %s5 = inlined_call_operand.hbm [shape: f32[16,32], index: 5, kind: input, shape index: {}]
  %s6 = inlined_call_operand.hbm [shape: f32[16,32], index: 6, kind: output, shape index: {}]
  %s7 = sld [smem:[#allocation0]]
  $region54: #{tpu_custom_call.1} parent=0
    _
  %s9 = ssub.s32 1, %s7
  %s10 = scalar_select 0, %s9, %s7
  $region1: #{tpu_custom_call.1} parent=0
    #allocation3 [shape = 'u8[8192]{0}', space=vmem, size = 0x2000, scoped, tag = 'input window, operand 0, single buffered']
    #allocation4 [shape = 's32[1]{0}', space=sflag, size = 0x4, scoped, tag = 'scoped memory for tpu_custom_call.1']
    #allocation5 [shape = 's32[1]{0}', space=sflag, size = 0x4, scoped, tag = 'scoped memory for tpu_custom_call.1']
    #allocation6 [shape = 'u8[32768]{0}', space=vmem, size = 0x8000, scoped, tag = 'input window, operand 1, single buffered']
    #allocation7 [shape = 's32[1]{0}', space=sflag, size = 0x4, scoped, tag = 'scoped memory for tpu_custom_call.1']
    #allocation8 [shape = 'u8[16384]{0}', space=vmem, size = 0x4000, scoped, tag = 'input window, operand 2, single buffered']
    #allocation9 [shape = 'u8[8192]{0}', space=vmem, size = 0x2000, scoped, tag = 'input window, operand 4, single buffered']
    #allocation10 [shape = 's32[1]{0}', space=sflag, size = 0x4, scoped, tag = 'scoped memory for tpu_custom_call.1']
    #allocation11 [shape = 'u8[8192]{0}', space=vmem, size = 0x2000, scoped, tag = 'input window, operand 5, single buffered']
    #allocation12 [shape = 'u8[8192]{0}', space=vmem, size = 0x2000, scoped, tag = 'output window, operand 0, single buffered']
    %11 = vsyncpa [#allocation4], 0
    %12 = vsyncpa [#allocation7], 0
    %13 = vsyncpa [#allocation10], 0
    %14 = vsyncpa [#allocation5], 0
    // Predicated region
    $region2: #{tpu_custom_call.1} parent=1 // pred_check
      _
    $region3: #{tpu_custom_call.1} parent=1 // pred_check_branch
      %16 = sbr.rel (0) target = $region5
    $region4: #{tpu_custom_call.1} parent=1 // pred_region
      %18 = vsyncadd [#allocation4], 0
      %s19 = sshll.u32 %s0, 4
      %s20 = int_to_ptr.hbm [resolvable:$true] %s19
      %s21 = sshll.u32 [#allocation3], 4
      %s22 = int_to_ptr.vmem [resolvable:$true] %s21
      %27 = dma.hbm_to_vmem [thread:$0]  %s20, 256, %s22, [#allocation4], 128, 128, 8
    $region5: #{tpu_custom_call.1} parent=1 // pred_fallthru
      _
    // Predicated region
    $region6: #{tpu_custom_call.1} parent=1 // pred_check
      _
    $region7: #{tpu_custom_call.1} parent=1 // pred_check_branch
      %29 = sbr.rel (0) target = $region9
    $region8: #{tpu_custom_call.1} parent=1 // pred_region
      %31 = vsyncadd [#allocation7], 0
      %s32 = sshll.u32 %s1, 4
      %s33 = int_to_ptr.hbm [resolvable:$true] %s32
      %s34 = sshll.u32 [#allocation6], 4
      %s35 = int_to_ptr.vmem [resolvable:$true] %s34
      %40 = dma.hbm_to_vmem [thread:$0]  %s33, 1024, %s35, [#allocation7], 256, 256, 16
    $region9: #{tpu_custom_call.1} parent=1 // pred_fallthru
      _
    // Predicated region
    $region10: #{tpu_custom_call.1} parent=1 // pred_check
      _
    $region11: #{tpu_custom_call.1} parent=1 // pred_check_branch
      %42 = sbr.rel (0) target = $region13
    $region12: #{tpu_custom_call.1} parent=1 // pred_region
      %44 = vsyncadd [#allocation7], 0
      %s45 = sshll.u32 %s2, 4
      %s46 = int_to_ptr.hbm [resolvable:$true] %s45
      %s47 = sshll.u32 [#allocation8], 4
      %s48 = int_to_ptr.vmem [resolvable:$true] %s47
      %53 = dma.hbm_to_vmem [thread:$0]  %s46, 512, %s48, [#allocation7], 128, 128, 8
    $region13: #{tpu_custom_call.1} parent=1 // pred_fallthru
      _
    // Predicated region
    $region14: #{tpu_custom_call.1} parent=1 // pred_check
      _
    $region15: #{tpu_custom_call.1} parent=1 // pred_check_branch
      %55 = sbr.rel (0) target = $region17
    $region16: #{tpu_custom_call.1} parent=1 // pred_region
      _
    $region17: #{tpu_custom_call.1} parent=1 // pred_fallthru
      _
    // Predicated region
    $region18: #{tpu_custom_call.1} parent=1 // pred_check
      _
    $region19: #{tpu_custom_call.1} parent=1 // pred_check_branch
      %57 = sbr.rel (0) target = $region21
    $region20: #{tpu_custom_call.1} parent=1 // pred_region
      %59 = vsyncadd [#allocation10], 0
      %s60 = sshll.u32 %s4, 4
      %s61 = int_to_ptr.hbm [resolvable:$true] %s60
      %s62 = sshll.u32 [#allocation9], 4
      %s63 = int_to_ptr.vmem [resolvable:$true] %s62
      %68 = dma.hbm_to_vmem [thread:$0]  %s61, 256, %s63, [#allocation10], 128, 128, 8
    $region21: #{tpu_custom_call.1} parent=1 // pred_fallthru
      _
    // Predicated region
    $region22: #{tpu_custom_call.1} parent=1 // pred_check
      _
    $region23: #{tpu_custom_call.1} parent=1 // pred_check_branch
      %70 = sbr.rel (0) target = $region25
    $region24: #{tpu_custom_call.1} parent=1 // pred_region
      %72 = vsyncadd [#allocation10], 0
      %s73 = sshll.u32 %s5, 4
      %s74 = int_to_ptr.hbm [resolvable:$true] %s73
      %s75 = sshll.u32 [#allocation11], 4
      %s76 = int_to_ptr.vmem [resolvable:$true] %s75
      %81 = dma.hbm_to_vmem [thread:$0]  %s74, 256, %s76, [#allocation10], 128, 128, 8
    $region25: #{tpu_custom_call.1} parent=1 // pred_fallthru
      _
    // Predicated region
    $region26: #{tpu_custom_call.1} parent=1 // pred_check
      _
    $region27: #{tpu_custom_call.1} parent=1 // pred_check_branch
      %83 = sbr.rel (0) target = $region29
    $region28: #{tpu_custom_call.1} parent=1 // pred_region
      %85 = dma.done [#allocation4], 256
    $region29: #{tpu_custom_call.1} parent=1 // pred_fallthru
      _
    // Predicated region
    $region30: #{tpu_custom_call.1} parent=1 // pred_check
      _
    $region31: #{tpu_custom_call.1} parent=1 // pred_check_branch
      %87 = sbr.rel (0) target = $region33
    $region32: #{tpu_custom_call.1} parent=1 // pred_region
      %89 = dma.done [#allocation7], 1024
    $region33: #{tpu_custom_call.1} parent=1 // pred_fallthru
      _
    // Predicated region
    $region34: #{tpu_custom_call.1} parent=1 // pred_check
      _
    $region35: #{tpu_custom_call.1} parent=1 // pred_check_branch
      %91 = sbr.rel (0) target = $region37
    $region36: #{tpu_custom_call.1} parent=1 // pred_region
      %93 = dma.done [#allocation7], 512
    $region37: #{tpu_custom_call.1} parent=1 // pred_fallthru
      _
    // Predicated region
    $region38: #{tpu_custom_call.1} parent=1 // pred_check
      _
    $region39: #{tpu_custom_call.1} parent=1 // pred_check_branch
      %95 = sbr.rel (0) target = $region41
    $region40: #{tpu_custom_call.1} parent=1 // pred_region
      %97 = dma.done [#allocation10], 256
    $region41: #{tpu_custom_call.1} parent=1 // pred_fallthru
      _
    // Predicated region
    $region42: #{tpu_custom_call.1} parent=1 // pred_check
      _
    $region43: #{tpu_custom_call.1} parent=1 // pred_check_branch
      %99 = sbr.rel (0) target = $region45
    $region44: #{tpu_custom_call.1} parent=1 // pred_region
      %101 = dma.done [#allocation10], 256
    $region45: #{tpu_custom_call.1} parent=1 // pred_fallthru
      _
    %v102 = vld [vmem:[#allocation3] sm:$0xff]
    %v103 = vld [vmem:[#allocation3 + $0x8] sm:$0xff]
    %v104 = vld [vmem:[#allocation6] sm:$0xff]
    %v105 = vld [vmem:[#allocation6 + $0x8] sm:$0xff]
    %v106 = vld [vmem:[#allocation6 + $0x10] sm:$0xff]
    %v107 = vld [vmem:[#allocation6 + $0x18] sm:$0xff]
    %v108 = vld [vmem:[#allocation6 + $0x20] sm:$0xff]
    %v109 = vld [vmem:[#allocation6 + $0x28] sm:$0xff]
    %v110 = vld [vmem:[#allocation6 + $0x30] sm:$0xff]
    %v111 = vld [vmem:[#allocation6 + $0x38] sm:$0xff]
    %vm112 = vcmask 261120
    %v114 = vsel %vm112, %v102, 0
    %v117 = vsel %vm112, %v103, 0
    %119 = vmatpush.msra.mxu0 0.0
    %120 = vmatpush.msra.mxu0 0.0
    %121 = vmatpush.msra.mxu0 0.0
    %122 = vmatpush.msra.mxu0 0.0
    %123 = vmatpush.msra.mxu0 0.0
    %124 = vmatpush.msra.mxu0 0.0
    %125 = vmatpush.msra.mxu0 0.0
    %126 = vmatpush.msra.mxu0 0.0
    %127 = vmatpush.msra.mxu0 0.0
    %128 = vmatpush.msra.mxu0 0.0
    %129 = vmatpush.msra.mxu0 0.0
    %130 = vmatpush.msra.mxu0 0.0
    %131 = vmatpush.msra.mxu0 %v110
    %132 = vmatpush.msra.mxu0 %v108
    %133 = vmatpush.msra.mxu0 %v106
    %134 = vmatpush.msra.mxu0 %v104
    %135 = vmatmul.f32.gmra.mxu0 %v114
    %v136 = vpop.f32.mrf.mxu0
    %v137 = vadd.f32 0.0, %v136
    %138 = vmatmul.f32.gmra.mxu0 %v117
    %v139 = vpop.f32.mrf.mxu0
    %v140 = vadd.f32 0.0, %v139
    %141 = vdwg.mxu0
    %142 = vmatpush.msra.mxu0 0.0
    %143 = vmatpush.msra.mxu0 0.0
    %144 = vmatpush.msra.mxu0 0.0
    %145 = vmatpush.msra.mxu0 0.0
    %146 = vmatpush.msra.mxu0 0.0
    %147 = vmatpush.msra.mxu0 0.0
    %148 = vmatpush.msra.mxu0 0.0
    %149 = vmatpush.msra.mxu0 0.0
    %150 = vmatpush.msra.mxu0 0.0
    %151 = vmatpush.msra.mxu0 0.0
    %152 = vmatpush.msra.mxu0 0.0
    %153 = vmatpush.msra.mxu0 0.0
    %154 = vmatpush.msra.mxu0 %v111
    %155 = vmatpush.msra.mxu0 %v109
    %156 = vmatpush.msra.mxu0 %v107
    %157 = vmatpush.msra.mxu0 %v105
    %158 = vmatmul.f32.gmra.mxu0 %v114
    %v159 = vpop.f32.mrf.mxu0
    %v160 = vadd.f32 0.0, %v159
    %161 = vmatmul.f32.gmra.mxu0 %v117
    %v162 = vpop.f32.mrf.mxu0
    %v163 = vadd.f32 0.0, %v162
    %164 = vdwg.mxu0
    %v165 = vld [vmem:[#allocation9] sm:$0xff]
    %v166 = vld [vmem:[#allocation9 + $0x8] sm:$0xff]
    %v167 = vld [vmem:[#allocation11] sm:$0xff]
    %v168 = vld [vmem:[#allocation11 + $0x8] sm:$0xff]
    %v169 = vmul.f32 %v137, %v165
    %v170 = vmul.f32 %v140, %v166
    %173 = vrot.lane.b32.xlu0 %v167, 32
    %v174 = vpop.permute.xlu0 %173
    %175 = vrot.lane.b32.xlu0 %v168, 32
    %v176 = vpop.permute.xlu0 %175
    %v179 = vmul.f32 %v137, %v174
    %v180 = vmul.f32 %v140, %v176
    %183 = vrot.lane.b32.xlu0 %v179, 96
    %v184 = vpop.permute.xlu0 %183
    %185 = vrot.lane.b32.xlu0 %v180, 96
    %v186 = vpop.permute.xlu0 %185
    %v189 = vadd.f32 %v169, %v184
    %v190 = vadd.f32 %v170, %v186
    %193 = vrot.lane.b32.xlu0 %v165, 64
    %v194 = vpop.permute.xlu0 %193
    %195 = vrot.lane.b32.xlu0 %v166, 64
    %v196 = vpop.permute.xlu0 %195
    %v199 = vmul.f32 %v137, %v194
    %v200 = vmul.f32 %v140, %v196
    %201 = vrot.lane.b32.xlu0 %v167, 96
    %v202 = vpop.permute.xlu0 %201
    %203 = vrot.lane.b32.xlu0 %v168, 96
    %v204 = vpop.permute.xlu0 %203
    %v207 = vmul.f32 %v137, %v202
    %v208 = vmul.f32 %v140, %v204
    %211 = vrot.lane.b32.xlu0 %v207, 96
    %v212 = vpop.permute.xlu0 %211
    %213 = vrot.lane.b32.xlu0 %v208, 96
    %v214 = vpop.permute.xlu0 %213
    %v217 = vadd.f32 %v199, %v212
    %v218 = vadd.f32 %v200, %v214
    %220 = vrot.lane.b32.xlu0 %v217, 64
    %v221 = vpop.permute.xlu0 %220
    %vm222 = vcmask 64512
    %v224 = vsel %vm222, %v189, 0
    %v226 = vsel %vm222, %v221, 0
    %228 = vmatpush.xpose.msra.mxu0 0.0
    %229 = vmatpush.xpose.msra.mxu0 0.0
    %230 = vmatpush.xpose.msra.mxu0 0.0
    %231 = vmatpush.xpose.msra.mxu0 0.0
    %232 = vmatpush.xpose.msra.mxu0 0.0
    %233 = vmatpush.xpose.msra.mxu0 0.0
    %234 = vmatpush.xpose.msra.mxu0 0.0
    %235 = vmatpush.xpose.msra.mxu0 0.0
    %236 = vmatpush.xpose.msra.mxu0 0.0
    %237 = vmatpush.xpose.msra.mxu0 0.0
    %238 = vmatpush.xpose.msra.mxu0 0.0
    %239 = vmatpush.xpose.msra.mxu0 0.0
    %240 = vmatpush.xpose.msra.mxu0 0.0
    %241 = vmatpush.xpose.msra.mxu0 0.0
    %242 = vmatpush.xpose.msra.mxu0 0.0
    %243 = vmatpush.xpose.msra.mxu0 %v226
    %244 = vmatmul.f32.gmra.mxu0 %v224
    %v245 = vpop.f32.mrf.mxu0
    %v246 = vadd.f32 0.0, %v245
    %247 = vdwg.mxu0
    %v248 = vsel %vm222, %v246, -inf
    %249 = vmax.xlane.f32.xlu0 %v248
    %v250 = vpop.xlane.xlu0 %249
    %v251 = vsub.f32 %v246, %v250
    %v252 = vmul.f32 %v251, 1.442695
    %v253 = vpow.pop %v252
    %v254 = vsel %vm222, %v253, 0.0
    %255 = vadd.xlane.f32.xlu0 %v254
    %v256 = vpop.xlane.xlu0 %255
    %v257 = vrcp.pop %v256
    %v258 = vmul.f32 %v253, %v257
    %v260 = vsel %vm222, %v258, 0
    %262 = vmatpush.msra.mxu0 0.0
    %263 = vmatpush.msra.mxu0 0.0
    %264 = vmatpush.msra.mxu0 0.0
    %265 = vmatpush.msra.mxu0 0.0
    %266 = vmatpush.msra.mxu0 0.0
    %267 = vmatpush.msra.mxu0 0.0
    %268 = vmatpush.msra.mxu0 0.0
    %269 = vmatpush.msra.mxu0 0.0
    %270 = vmatpush.msra.mxu0 0.0
    %271 = vmatpush.msra.mxu0 0.0
    %272 = vmatpush.msra.mxu0 0.0
    %273 = vmatpush.msra.mxu0 0.0
    %274 = vmatpush.msra.mxu0 0.0
    %275 = vmatpush.msra.mxu0 0.0
    %276 = vmatpush.msra.mxu0 0.0
    %277 = vmatpush.msra.mxu0 %v160
    %278 = vmatmul.f32.gmra.mxu0 %v260
    %v279 = vpop.f32.mrf.mxu0
    %v280 = vadd.f32 0.0, %v279
    %281 = vdwg.mxu0
    %282 = vst.msk [vmem:[#allocation2] sm:$0xff] %vm222, %v280
    %283 = vrot.lane.b32.xlu0 %v189, 120
    %v284 = vpop.permute.xlu0 %283
    %285 = vrot.lane.b32.xlu0 %v217, 56
    %v286 = vpop.permute.xlu0 %285
    %v287 = vsel %vm222, %v284, 0
    %v289 = vsel %vm222, %v286, 0
    %291 = vmatpush.xpose.msra.mxu0 0.0
    %292 = vmatpush.xpose.msra.mxu0 0.0
    %293 = vmatpush.xpose.msra.mxu0 0.0
    %294 = vmatpush.xpose.msra.mxu0 0.0
    %295 = vmatpush.xpose.msra.mxu0 0.0
    %296 = vmatpush.xpose.msra.mxu0 0.0
    %297 = vmatpush.xpose.msra.mxu0 0.0
    %298 = vmatpush.xpose.msra.mxu0 0.0
    %299 = vmatpush.xpose.msra.mxu0 0.0
    %300 = vmatpush.xpose.msra.mxu0 0.0
    %301 = vmatpush.xpose.msra.mxu0 0.0
    %302 = vmatpush.xpose.msra.mxu0 0.0
    %303 = vmatpush.xpose.msra.mxu0 0.0
    %304 = vmatpush.xpose.msra.mxu0 0.0
    %305 = vmatpush.xpose.msra.mxu0 0.0
    %306 = vmatpush.xpose.msra.mxu0 %v289
    %307 = vmatmul.f32.gmra.mxu0 %v287
    %v308 = vpop.f32.mrf.mxu0
    %v309 = vadd.f32 0.0, %v308
    %310 = vdwg.mxu0
    %v311 = vsel %vm222, %v309, -inf
    %312 = vmax.xlane.f32.xlu0 %v311
    %v313 = vpop.xlane.xlu0 %312
    %v314 = vsub.f32 %v309, %v313
    %v315 = vmul.f32 %v314, 1.442695
    %v316 = vpow.pop %v315
    %v317 = vsel %vm222, %v316, 0.0
    %318 = vadd.xlane.f32.xlu0 %v317
    %v319 = vpop.xlane.xlu0 %318
    %v320 = vrcp.pop %v319
    %v321 = vmul.f32 %v316, %v320
    %323 = vrot.lane.b32.xlu0 %v160, 120
    %v324 = vpop.permute.xlu0 %323
    %v327 = vsel %vm222, %v321, 0
    %329 = vmatpush.msra.mxu0 0.0
    %330 = vmatpush.msra.mxu0 0.0
    %331 = vmatpush.msra.mxu0 0.0
    %332 = vmatpush.msra.mxu0 0.0
    %333 = vmatpush.msra.mxu0 0.0
    %334 = vmatpush.msra.mxu0 0.0
    %335 = vmatpush.msra.mxu0 0.0
    %336 = vmatpush.msra.mxu0 0.0
    %337 = vmatpush.msra.mxu0 0.0
    %338 = vmatpush.msra.mxu0 0.0
    %339 = vmatpush.msra.mxu0 0.0
    %340 = vmatpush.msra.mxu0 0.0
    %341 = vmatpush.msra.mxu0 0.0
    %342 = vmatpush.msra.mxu0 0.0
    %343 = vmatpush.msra.mxu0 0.0
    %344 = vmatpush.msra.mxu0 %v324
    %345 = vmatmul.f32.gmra.mxu0 %v327
    %v346 = vpop.f32.mrf.mxu0
    %v347 = vadd.f32 0.0, %v346
    %348 = vdwg.mxu0
    %350 = vrot.lane.b32.xlu0 %v347, 8
    %v351 = vpop.permute.xlu0 %350
    %vm353 = vcmask 130112
    %354 = vst.msk [vmem:[#allocation2] sm:$0xff] %vm353, %v351
    %355 = vrot.lane.b32.xlu0 %v189, 112
    %v356 = vpop.permute.xlu0 %355
    %357 = vrot.lane.b32.xlu0 %v217, 48
    %v358 = vpop.permute.xlu0 %357
    %v359 = vsel %vm222, %v356, 0
    %v361 = vsel %vm222, %v358, 0
    %363 = vmatpush.xpose.msra.mxu0 0.0
    %364 = vmatpush.xpose.msra.mxu0 0.0
    %365 = vmatpush.xpose.msra.mxu0 0.0
    %366 = vmatpush.xpose.msra.mxu0 0.0
    %367 = vmatpush.xpose.msra.mxu0 0.0
    %368 = vmatpush.xpose.msra.mxu0 0.0
    %369 = vmatpush.xpose.msra.mxu0 0.0
    %370 = vmatpush.xpose.msra.mxu0 0.0
    %371 = vmatpush.xpose.msra.mxu0 0.0
    %372 = vmatpush.xpose.msra.mxu0 0.0
    %373 = vmatpush.xpose.msra.mxu0 0.0
    %374 = vmatpush.xpose.msra.mxu0 0.0
    %375 = vmatpush.xpose.msra.mxu0 0.0
    %376 = vmatpush.xpose.msra.mxu0 0.0
    %377 = vmatpush.xpose.msra.mxu0 0.0
    %378 = vmatpush.xpose.msra.mxu0 %v361
    %379 = vmatmul.f32.gmra.mxu0 %v359
    %v380 = vpop.f32.mrf.mxu0
    %v381 = vadd.f32 0.0, %v380
    %382 = vdwg.mxu0
    %v383 = vsel %vm222, %v381, -inf
    %384 = vmax.xlane.f32.xlu0 %v383
    %v385 = vpop.xlane.xlu0 %384
    %v386 = vsub.f32 %v381, %v385
    %v387 = vmul.f32 %v386, 1.442695
    %v388 = vpow.pop %v387
    %v389 = vsel %vm222, %v388, 0.0
    %390 = vadd.xlane.f32.xlu0 %v389
    %v391 = vpop.xlane.xlu0 %390
    %v392 = vrcp.pop %v391
    %v393 = vmul.f32 %v388, %v392
    %394 = vrot.lane.b32.xlu0 %v160, 112
    %v395 = vpop.permute.xlu0 %394
    %v398 = vsel %vm222, %v393, 0
    %400 = vmatpush.msra.mxu0 0.0
    %401 = vmatpush.msra.mxu0 0.0
    %402 = vmatpush.msra.mxu0 0.0
    %403 = vmatpush.msra.mxu0 0.0
    %404 = vmatpush.msra.mxu0 0.0
    %405 = vmatpush.msra.mxu0 0.0
    %406 = vmatpush.msra.mxu0 0.0
    %407 = vmatpush.msra.mxu0 0.0
    %408 = vmatpush.msra.mxu0 0.0
    %409 = vmatpush.msra.mxu0 0.0
    %410 = vmatpush.msra.mxu0 0.0
    %411 = vmatpush.msra.mxu0 0.0
    %412 = vmatpush.msra.mxu0 0.0
    %413 = vmatpush.msra.mxu0 0.0
    %414 = vmatpush.msra.mxu0 0.0
    %415 = vmatpush.msra.mxu0 %v395
    %416 = vmatmul.f32.gmra.mxu0 %v398
    %v417 = vpop.f32.mrf.mxu0
    %v418 = vadd.f32 0.0, %v417
    %419 = vdwg.mxu0
    %421 = vrot.lane.b32.xlu0 %v418, 16
    %v422 = vpop.permute.xlu0 %421
    %vm424 = vcmask 195712
    %425 = vst.msk [vmem:[#allocation2] sm:$0xff] %vm424, %v422
    %426 = vrot.lane.b32.xlu0 %v189, 104
    %v427 = vpop.permute.xlu0 %426
    %428 = vrot.lane.b32.xlu0 %v217, 40
    %v429 = vpop.permute.xlu0 %428
    %v430 = vsel %vm222, %v427, 0
    %v432 = vsel %vm222, %v429, 0
    %434 = vmatpush.xpose.msra.mxu0 0.0
    %435 = vmatpush.xpose.msra.mxu0 0.0
    %436 = vmatpush.xpose.msra.mxu0 0.0
    %437 = vmatpush.xpose.msra.mxu0 0.0
    %438 = vmatpush.xpose.msra.mxu0 0.0
    %439 = vmatpush.xpose.msra.mxu0 0.0
    %440 = vmatpush.xpose.msra.mxu0 0.0
    %441 = vmatpush.xpose.msra.mxu0 0.0
    %442 = vmatpush.xpose.msra.mxu0 0.0
    %443 = vmatpush.xpose.msra.mxu0 0.0
    %444 = vmatpush.xpose.msra.mxu0 0.0
    %445 = vmatpush.xpose.msra.mxu0 0.0
    %446 = vmatpush.xpose.msra.mxu0 0.0
    %447 = vmatpush.xpose.msra.mxu0 0.0
    %448 = vmatpush.xpose.msra.mxu0 0.0
    %449 = vmatpush.xpose.msra.mxu0 %v432
    %450 = vmatmul.f32.gmra.mxu0 %v430
    %v451 = vpop.f32.mrf.mxu0
    %v452 = vadd.f32 0.0, %v451
    %453 = vdwg.mxu0
    %v454 = vsel %vm222, %v452, -inf
    %455 = vmax.xlane.f32.xlu0 %v454
    %v456 = vpop.xlane.xlu0 %455
    %v457 = vsub.f32 %v452, %v456
    %v458 = vmul.f32 %v457, 1.442695
    %v459 = vpow.pop %v458
    %v460 = vsel %vm222, %v459, 0.0
    %461 = vadd.xlane.f32.xlu0 %v460
    %v462 = vpop.xlane.xlu0 %461
    %v463 = vrcp.pop %v462
    %v464 = vmul.f32 %v459, %v463
    %465 = vrot.lane.b32.xlu0 %v160, 104
    %v466 = vpop.permute.xlu0 %465
    %v469 = vsel %vm222, %v464, 0
    %471 = vmatpush.msra.mxu0 0.0
    %472 = vmatpush.msra.mxu0 0.0
    %473 = vmatpush.msra.mxu0 0.0
    %474 = vmatpush.msra.mxu0 0.0
    %475 = vmatpush.msra.mxu0 0.0
    %476 = vmatpush.msra.mxu0 0.0
    %477 = vmatpush.msra.mxu0 0.0
    %478 = vmatpush.msra.mxu0 0.0
    %479 = vmatpush.msra.mxu0 0.0
    %480 = vmatpush.msra.mxu0 0.0
    %481 = vmatpush.msra.mxu0 0.0
    %482 = vmatpush.msra.mxu0 0.0
    %483 = vmatpush.msra.mxu0 0.0
    %484 = vmatpush.msra.mxu0 0.0
    %485 = vmatpush.msra.mxu0 0.0
    %486 = vmatpush.msra.mxu0 %v466
    %487 = vmatmul.f32.gmra.mxu0 %v469
    %v488 = vpop.f32.mrf.mxu0
    %v489 = vadd.f32 0.0, %v488
    %490 = vdwg.mxu0
    %492 = vrot.lane.b32.xlu0 %v489, 24
    %v493 = vpop.permute.xlu0 %492
    %vm495 = vcmask 261312
    %496 = vst.msk [vmem:[#allocation2] sm:$0xff] %vm495, %v493
    %498 = vrot.lane.b32.xlu0 %v218, 64
    %v499 = vpop.permute.xlu0 %498
    %v501 = vsel %vm222, %v190, 0
    %v503 = vsel %vm222, %v499, 0
    %505 = vmatpush.xpose.msra.mxu0 0.0
    %506 = vmatpush.xpose.msra.mxu0 0.0
    %507 = vmatpush.xpose.msra.mxu0 0.0
    %508 = vmatpush.xpose.msra.mxu0 0.0
    %509 = vmatpush.xpose.msra.mxu0 0.0
    %510 = vmatpush.xpose.msra.mxu0 0.0
    %511 = vmatpush.xpose.msra.mxu0 0.0
    %512 = vmatpush.xpose.msra.mxu0 0.0
    %513 = vmatpush.xpose.msra.mxu0 0.0
    %514 = vmatpush.xpose.msra.mxu0 0.0
    %515 = vmatpush.xpose.msra.mxu0 0.0
    %516 = vmatpush.xpose.msra.mxu0 0.0
    %517 = vmatpush.xpose.msra.mxu0 0.0
    %518 = vmatpush.xpose.msra.mxu0 0.0
    %519 = vmatpush.xpose.msra.mxu0 0.0
    %520 = vmatpush.xpose.msra.mxu0 %v503
    %521 = vmatmul.f32.gmra.mxu0 %v501
    %v522 = vpop.f32.mrf.mxu0
    %v523 = vadd.f32 0.0, %v522
    %524 = vdwg.mxu0
    %v525 = vsel %vm222, %v523, -inf
    %526 = vmax.xlane.f32.xlu0 %v525
    %v527 = vpop.xlane.xlu0 %526
    %v528 = vsub.f32 %v523, %v527
    %v529 = vmul.f32 %v528, 1.442695
    %v530 = vpow.pop %v529
    %v531 = vsel %vm222, %v530, 0.0
    %532 = vadd.xlane.f32.xlu0 %v531
    %v533 = vpop.xlane.xlu0 %532
    %v534 = vrcp.pop %v533
    %v535 = vmul.f32 %v530, %v534
    %v537 = vsel %vm222, %v535, 0
    %539 = vmatpush.msra.mxu0 0.0
    %540 = vmatpush.msra.mxu0 0.0
    %541 = vmatpush.msra.mxu0 0.0
    %542 = vmatpush.msra.mxu0 0.0
    %543 = vmatpush.msra.mxu0 0.0
    %544 = vmatpush.msra.mxu0 0.0
    %545 = vmatpush.msra.mxu0 0.0
    %546 = vmatpush.msra.mxu0 0.0
    %547 = vmatpush.msra.mxu0 0.0
    %548 = vmatpush.msra.mxu0 0.0
    %549 = vmatpush.msra.mxu0 0.0
    %550 = vmatpush.msra.mxu0 0.0
    %551 = vmatpush.msra.mxu0 0.0
    %552 = vmatpush.msra.mxu0 0.0
    %553 = vmatpush.msra.mxu0 0.0
    %554 = vmatpush.msra.mxu0 %v163
    %555 = vmatmul.f32.gmra.mxu0 %v537
    %v556 = vpop.f32.mrf.mxu0
    %v557 = vadd.f32 0.0, %v556
    %558 = vdwg.mxu0
    %559 = vst.msk [vmem:[#allocation2 + $0x8] sm:$0xff] %vm222, %v557
    %560 = vrot.lane.b32.xlu0 %v190, 120
    %v561 = vpop.permute.xlu0 %560
    %562 = vrot.lane.b32.xlu0 %v218, 56
    %v563 = vpop.permute.xlu0 %562
    %v564 = vsel %vm222, %v561, 0
    %v566 = vsel %vm222, %v563, 0
    %568 = vmatpush.xpose.msra.mxu0 0.0
    %569 = vmatpush.xpose.msra.mxu0 0.0
    %570 = vmatpush.xpose.msra.mxu0 0.0
    %571 = vmatpush.xpose.msra.mxu0 0.0
    %572 = vmatpush.xpose.msra.mxu0 0.0
    %573 = vmatpush.xpose.msra.mxu0 0.0
    %574 = vmatpush.xpose.msra.mxu0 0.0
    %575 = vmatpush.xpose.msra.mxu0 0.0
    %576 = vmatpush.xpose.msra.mxu0 0.0
    %577 = vmatpush.xpose.msra.mxu0 0.0
    %578 = vmatpush.xpose.msra.mxu0 0.0
    %579 = vmatpush.xpose.msra.mxu0 0.0
    %580 = vmatpush.xpose.msra.mxu0 0.0
    %581 = vmatpush.xpose.msra.mxu0 0.0
    %582 = vmatpush.xpose.msra.mxu0 0.0
    %583 = vmatpush.xpose.msra.mxu0 %v566
    %584 = vmatmul.f32.gmra.mxu0 %v564
    %v585 = vpop.f32.mrf.mxu0
    %v586 = vadd.f32 0.0, %v585
    %587 = vdwg.mxu0
    %v588 = vsel %vm222, %v586, -inf
    %589 = vmax.xlane.f32.xlu0 %v588
    %v590 = vpop.xlane.xlu0 %589
    %v591 = vsub.f32 %v586, %v590
    %v592 = vmul.f32 %v591, 1.442695
    %v593 = vpow.pop %v592
    %v594 = vsel %vm222, %v593, 0.0
    %595 = vadd.xlane.f32.xlu0 %v594
    %v596 = vpop.xlane.xlu0 %595
    %v597 = vrcp.pop %v596
    %v598 = vmul.f32 %v593, %v597
    %600 = vrot.lane.b32.xlu0 %v163, 120
    %v601 = vpop.permute.xlu0 %600
    %v604 = vsel %vm222, %v598, 0
    %606 = vmatpush.msra.mxu0 0.0
    %607 = vmatpush.msra.mxu0 0.0
    %608 = vmatpush.msra.mxu0 0.0
    %609 = vmatpush.msra.mxu0 0.0
    %610 = vmatpush.msra.mxu0 0.0
    %611 = vmatpush.msra.mxu0 0.0
    %612 = vmatpush.msra.mxu0 0.0
    %613 = vmatpush.msra.mxu0 0.0
    %614 = vmatpush.msra.mxu0 0.0
    %615 = vmatpush.msra.mxu0 0.0
    %616 = vmatpush.msra.mxu0 0.0
    %617 = vmatpush.msra.mxu0 0.0
    %618 = vmatpush.msra.mxu0 0.0
    %619 = vmatpush.msra.mxu0 0.0
    %620 = vmatpush.msra.mxu0 0.0
    %621 = vmatpush.msra.mxu0 %v601
    %622 = vmatmul.f32.gmra.mxu0 %v604
    %v623 = vpop.f32.mrf.mxu0
    %v624 = vadd.f32 0.0, %v623
    %625 = vdwg.mxu0
    %627 = vrot.lane.b32.xlu0 %v624, 8
    %v628 = vpop.permute.xlu0 %627
    %630 = vst.msk [vmem:[#allocation2 + $0x8] sm:$0xff] %vm353, %v628
    %631 = vrot.lane.b32.xlu0 %v190, 112
    %v632 = vpop.permute.xlu0 %631
    %633 = vrot.lane.b32.xlu0 %v218, 48
    %v634 = vpop.permute.xlu0 %633
    %v635 = vsel %vm222, %v632, 0
    %v637 = vsel %vm222, %v634, 0
    %639 = vmatpush.xpose.msra.mxu0 0.0
    %640 = vmatpush.xpose.msra.mxu0 0.0
    %641 = vmatpush.xpose.msra.mxu0 0.0
    %642 = vmatpush.xpose.msra.mxu0 0.0
    %643 = vmatpush.xpose.msra.mxu0 0.0
    %644 = vmatpush.xpose.msra.mxu0 0.0
    %645 = vmatpush.xpose.msra.mxu0 0.0
    %646 = vmatpush.xpose.msra.mxu0 0.0
    %647 = vmatpush.xpose.msra.mxu0 0.0
    %648 = vmatpush.xpose.msra.mxu0 0.0
    %649 = vmatpush.xpose.msra.mxu0 0.0
    %650 = vmatpush.xpose.msra.mxu0 0.0
    %651 = vmatpush.xpose.msra.mxu0 0.0
    %652 = vmatpush.xpose.msra.mxu0 0.0
    %653 = vmatpush.xpose.msra.mxu0 0.0
    %654 = vmatpush.xpose.msra.mxu0 %v637
    %655 = vmatmul.f32.gmra.mxu0 %v635
    %v656 = vpop.f32.mrf.mxu0
    %v657 = vadd.f32 0.0, %v656
    %658 = vdwg.mxu0
    %v659 = vsel %vm222, %v657, -inf
    %660 = vmax.xlane.f32.xlu0 %v659
    %v661 = vpop.xlane.xlu0 %660
    %v662 = vsub.f32 %v657, %v661
    %v663 = vmul.f32 %v662, 1.442695
    %v664 = vpow.pop %v663
    %v665 = vsel %vm222, %v664, 0.0
    %666 = vadd.xlane.f32.xlu0 %v665
    %v667 = vpop.xlane.xlu0 %666
    %v668 = vrcp.pop %v667
    %v669 = vmul.f32 %v664, %v668
    %670 = vrot.lane.b32.xlu0 %v163, 112
    %v671 = vpop.permute.xlu0 %670
    %v674 = vsel %vm222, %v669, 0
    %676 = vmatpush.msra.mxu0 0.0
    %677 = vmatpush.msra.mxu0 0.0
    %678 = vmatpush.msra.mxu0 0.0
    %679 = vmatpush.msra.mxu0 0.0
    %680 = vmatpush.msra.mxu0 0.0
    %681 = vmatpush.msra.mxu0 0.0
    %682 = vmatpush.msra.mxu0 0.0
    %683 = vmatpush.msra.mxu0 0.0
    %684 = vmatpush.msra.mxu0 0.0
    %685 = vmatpush.msra.mxu0 0.0
    %686 = vmatpush.msra.mxu0 0.0
    %687 = vmatpush.msra.mxu0 0.0
    %688 = vmatpush.msra.mxu0 0.0
    %689 = vmatpush.msra.mxu0 0.0
    %690 = vmatpush.msra.mxu0 0.0
    %691 = vmatpush.msra.mxu0 %v671
    %692 = vmatmul.f32.gmra.mxu0 %v674
    %v693 = vpop.f32.mrf.mxu0
    %v694 = vadd.f32 0.0, %v693
    %695 = vdwg.mxu0
    %697 = vrot.lane.b32.xlu0 %v694, 16
    %v698 = vpop.permute.xlu0 %697
    %700 = vst.msk [vmem:[#allocation2 + $0x8] sm:$0xff] %vm424, %v698
    %701 = vrot.lane.b32.xlu0 %v190, 104
    %v702 = vpop.permute.xlu0 %701
    %703 = vrot.lane.b32.xlu0 %v218, 40
    %v704 = vpop.permute.xlu0 %703
    %v705 = vsel %vm222, %v702, 0
    %v707 = vsel %vm222, %v704, 0
    %709 = vmatpush.xpose.msra.mxu0 0.0
    %710 = vmatpush.xpose.msra.mxu0 0.0
    %711 = vmatpush.xpose.msra.mxu0 0.0
    %712 = vmatpush.xpose.msra.mxu0 0.0
    %713 = vmatpush.xpose.msra.mxu0 0.0
    %714 = vmatpush.xpose.msra.mxu0 0.0
    %715 = vmatpush.xpose.msra.mxu0 0.0
    %716 = vmatpush.xpose.msra.mxu0 0.0
    %717 = vmatpush.xpose.msra.mxu0 0.0
    %718 = vmatpush.xpose.msra.mxu0 0.0
    %719 = vmatpush.xpose.msra.mxu0 0.0
    %720 = vmatpush.xpose.msra.mxu0 0.0
    %721 = vmatpush.xpose.msra.mxu0 0.0
    %722 = vmatpush.xpose.msra.mxu0 0.0
    %723 = vmatpush.xpose.msra.mxu0 0.0
    %724 = vmatpush.xpose.msra.mxu0 %v707
    %725 = vmatmul.f32.gmra.mxu0 %v705
    %v726 = vpop.f32.mrf.mxu0
    %v727 = vadd.f32 0.0, %v726
    %728 = vdwg.mxu0
    %v729 = vsel %vm222, %v727, -inf
    %730 = vmax.xlane.f32.xlu0 %v729
    %v731 = vpop.xlane.xlu0 %730
    %v732 = vsub.f32 %v727, %v731
    %v733 = vmul.f32 %v732, 1.442695
    %v734 = vpow.pop %v733
    %v735 = vsel %vm222, %v734, 0.0
    %736 = vadd.xlane.f32.xlu0 %v735
    %v737 = vpop.xlane.xlu0 %736
    %v738 = vrcp.pop %v737
    %v739 = vmul.f32 %v734, %v738
    %740 = vrot.lane.b32.xlu0 %v163, 104
    %v741 = vpop.permute.xlu0 %740
    %v744 = vsel %vm222, %v739, 0
    %746 = vmatpush.msra.mxu0 0.0
    %747 = vmatpush.msra.mxu0 0.0
    %748 = vmatpush.msra.mxu0 0.0
    %749 = vmatpush.msra.mxu0 0.0
    %750 = vmatpush.msra.mxu0 0.0
    %751 = vmatpush.msra.mxu0 0.0
    %752 = vmatpush.msra.mxu0 0.0
    %753 = vmatpush.msra.mxu0 0.0
    %754 = vmatpush.msra.mxu0 0.0
    %755 = vmatpush.msra.mxu0 0.0
    %756 = vmatpush.msra.mxu0 0.0
    %757 = vmatpush.msra.mxu0 0.0
    %758 = vmatpush.msra.mxu0 0.0
    %759 = vmatpush.msra.mxu0 0.0
    %760 = vmatpush.msra.mxu0 0.0
    %761 = vmatpush.msra.mxu0 %v741
    %762 = vmatmul.f32.gmra.mxu0 %v744
    %v763 = vpop.f32.mrf.mxu0
    %v764 = vadd.f32 0.0, %v763
    %765 = vdwg.mxu0
    %767 = vrot.lane.b32.xlu0 %v764, 24
    %v768 = vpop.permute.xlu0 %767
    %770 = vst.msk [vmem:[#allocation2 + $0x8] sm:$0xff] %vm495, %v768
    %v771 = vld [vmem:[#allocation2] sm:$0xff]
    %v772 = vld [vmem:[#allocation2 + $0x8] sm:$0xff]
    %v773 = vld [vmem:[#allocation8] sm:$0xff]
    %v774 = vld [vmem:[#allocation8 + $0x8] sm:$0xff]
    %v775 = vld [vmem:[#allocation8 + $0x10] sm:$0xff]
    %v776 = vld [vmem:[#allocation8 + $0x18] sm:$0xff]
    %v777 = vld [vmem:[%s3] sm:$0x1]
    %v779 = vperm.slane %v777, 0
    %v782 = vsel %vm112, %v771, 0
    %v785 = vsel %vm112, %v772, 0
    %787 = vmatpush.msra.mxu0 0.0
    %788 = vmatpush.msra.mxu0 0.0
    %789 = vmatpush.msra.mxu0 0.0
    %790 = vmatpush.msra.mxu0 0.0
    %791 = vmatpush.msra.mxu0 0.0
    %792 = vmatpush.msra.mxu0 0.0
    %793 = vmatpush.msra.mxu0 0.0
    %794 = vmatpush.msra.mxu0 0.0
    %795 = vmatpush.msra.mxu0 0.0
    %796 = vmatpush.msra.mxu0 0.0
    %797 = vmatpush.msra.mxu0 0.0
    %798 = vmatpush.msra.mxu0 0.0
    %799 = vmatpush.msra.mxu0 %v776
    %800 = vmatpush.msra.mxu0 %v775
    %801 = vmatpush.msra.mxu0 %v774
    %802 = vmatpush.msra.mxu0 %v773
    %803 = vmatmul.f32.gmra.mxu0 %v782
    %v804 = vpop.f32.mrf.mxu0
    %v805 = vadd.f32 %v779, %v804
    %806 = vmatmul.f32.gmra.mxu0 %v785
    %v807 = vpop.f32.mrf.mxu0
    %v808 = vadd.f32 %v779, %v807
    %809 = vdwg.mxu0
    %810 = vst.msk [vmem:[#allocation12] sm:$0xff] %vm112, %v805
    %811 = vst.msk [vmem:[#allocation12 + $0x8] sm:$0xff] %vm112, %v808
    // Predicated region
    $region46: #{tpu_custom_call.1} parent=1 // pred_check
      _
    $region47: #{tpu_custom_call.1} parent=1 // pred_check_branch
      %813 = sbr.rel (0) target = $region49
    $region48: #{tpu_custom_call.1} parent=1 // pred_region
      %815 = vsyncadd [#allocation5], 0
      %s816 = sshll.u32 [#allocation12], 4
      %s817 = int_to_ptr.vmem [resolvable:$true] %s816
      %s818 = sshll.u32 %s6, 4
      %s819 = int_to_ptr.hbm [resolvable:$true] %s818
      %824 = dma.vmem_to_hbm [thread:$0]  %s817, 256, %s819, [#allocation5], 128, 128, 8
    $region49: #{tpu_custom_call.1} parent=1 // pred_fallthru
      _
    // Predicated region
    $region50: #{tpu_custom_call.1} parent=1 // pred_check
      _
    $region51: #{tpu_custom_call.1} parent=1 // pred_check_branch
      %826 = sbr.rel (0) target = $region53
    $region52: #{tpu_custom_call.1} parent=1 // pred_region
      %828 = dma.done [#allocation5], 256
    $region53: #{tpu_custom_call.1} parent=1 // pred_fallthru
      _
    %829 = vsyncpa [#allocation4], 1
    %830 = vsyncpa [#allocation7], 1
    %831 = vsyncpa [#allocation10], 1
    %832 = vsyncpa [#allocation5], 1

</llo_original>
